<compile_context>
chip_gen: v7x
topology: tpu7x:2x2x1
jax: 0.10.0
libtpu: 0.0.40
codegen_flags: <defaults>
</compile_context>

<pallas_src>
import jax
import jax.numpy as jnp
from jax.experimental import pallas as pl
from jax.experimental.pallas import tpu as pltpu


def mlp_kernel(x_ref, w1_ref, b1_ref, w2_ref, b2_ref, o_ref):
    x = x_ref[...]                       # (F, TN)  batch on the lane axis
    w1 = w1_ref[...]                     # (H, F)   PyTorch Linear.weight layout
    n_feature = x.shape[0]

    # First layer: contraction dim F is tiny (2) -> VPU broadcast FMAs, no MXU
    # push/drain. h is (H, TN): lane-dense, strip-mines cleanly over lanes.
    h = w1[:, 0:1] * x[0:1, :]           # (H,1) * (1,TN) -> (H, TN)
    for k in range(1, n_feature):        # static, unrolled at trace time
        h = h + w1[:, k:k + 1] * x[k:k + 1, :]
    h = jnp.maximum(h + b1_ref[...], 0.0)          # b1 (H,1) lane-broadcast

    # Second layer on the MXU: (O,H) @ (H,TN) -> (O,TN). The MXU N-dim is the
    # batch tile, so the result rows (and the final store) are lane-dense.
    y = jnp.dot(w2_ref[...], h, preferred_element_type=jnp.float32)
    o_ref[...] = (y + b2_ref[...]).astype(o_ref.dtype)


def net_forward(x, w1, b1, w2, b2, *, block_n=4096):
    """Forward pass of Net.

    Args:
      x:  (N, F) float32 input (PyTorch layout).
      w1: (H, F) hidden-layer weight (PyTorch Linear.weight layout).
      b1: (H,)   hidden-layer bias.
      w2: (O, H) output-layer weight.
      b2: (O,)   output-layer bias.
      block_n: batch tile (lanes); multiple of 128. Sweep 2048-8192 for very
        large point clouds; per-step VMEM use is tiny in this layout.
    Returns:
      (N, O) float32 logits.
    """
    N, F = x.shape
    H = w1.shape[0]
    O = w2.shape[0]

    # Batch is the lane (last) axis inside the kernel. These host transposes of
    # (N,2)/(N,2) are cheap; a production pipeline can store the point cloud
    # transposed and skip them entirely.
    x_t = x.T                            # (F, N)
    b1_c = b1.reshape(H, 1)
    b2_c = b2.reshape(O, 1)

    if N <= block_n:
        tn = N                           # single grid step; full-dim block is legal
    else:
        assert block_n % 128 == 0, "block_n must be a multiple of 128"
        tn = block_n
    grid = (pl.cdiv(N, tn),)             # ragged last block handled by Pallas
                                         # (per-column computation; no padding needed)

    out_t = pl.pallas_call(
        mlp_kernel,
        out_shape=jax.ShapeDtypeStruct((O, N), jnp.float32),
        grid=grid,
        in_specs=[
            pl.BlockSpec((F, tn), lambda i: (0, i)),   # batch-tiled input (lanes)
            pl.BlockSpec((H, F), lambda i: (0, 0)),    # resident weights/biases
            pl.BlockSpec((H, 1), lambda i: (0, 0)),
            pl.BlockSpec((O, H), lambda i: (0, 0)),
            pl.BlockSpec((O, 1), lambda i: (0, 0)),
        ],
        out_specs=pl.BlockSpec((O, tn), lambda i: (0, i)),
        compiler_params=pltpu.CompilerParams(
            dimension_semantics=("parallel",)          # shard batch across TCs (v7x)
        ),
    )(x_t, w1, b1_c, w2, b2_c)

    return out_t.T                        # (N, O)


def init_params(key, n_feature, n_hidden, n_output):
    """PyTorch-Linear-shaped params: weight (out, in), bias (out,)."""
    k1, k2, k3, k4 = jax.random.split(key, 4)
    lim1 = 1.0 / jnp.sqrt(n_feature)
    lim2 = 1.0 / jnp.sqrt(n_hidden)
    w1 = jax.random.uniform(k1, (n_hidden, n_feature), jnp.float32, -lim1, lim1)
    b1 = jax.random.uniform(k2, (n_hidden,), jnp.float32, -lim1, lim1)
    w2 = jax.random.uniform(k3, (n_output, n_hidden), jnp.float32, -lim2, lim2)
    b2 = jax.random.uniform(k4, (n_output,), jnp.float32, -lim2, lim2)
    return w1, b1, w2, b2


if __name__ == "__main__":
    # Shapes from the classification script: 100 points per cluster, 2 features,
    # 2 output classes; small hidden layer.
    n_feature, n_hidden, n_output = 2, 32, 2
    points_per_cluster = 100
    batch = 2 * points_per_cluster       # 200 — deliberately NOT a 128 multiple

    key = jax.random.PRNGKey(0)
    kx, kp = jax.random.split(key)

    # Synthetic clusters akin to torch.normal(+-2, 1).
    x0 = 2.0 + jax.random.normal(kx, (points_per_cluster, n_feature), jnp.float32)
    x1 = -2.0 + jax.random.normal(
        jax.random.fold_in(kx, 1), (points_per_cluster, n_feature), jnp.float32)
    x = jnp.concatenate([x0, x1], axis=0)

    w1, b1, w2, b2 = init_params(kp, n_feature, n_hidden, n_output)

    # block_n=128 so the small demo exercises a multi-step grid with a ragged
    # last block; production calls use the default (>=2048-lane) tile.
    out = net_forward(x, w1, b1, w2, b2, block_n=128)
    jax.block_until_ready(out)

    # Reference check in plain JAX (PyTorch Linear semantics).
    ref = jnp.maximum(x @ w1.T + b1, 0.0) @ w2.T + b2
    assert out.shape == (batch, n_output)
    assert jnp.allclose(out, ref, atol=1e-5), "mismatch vs reference"

    print("KERNEL_OK")
</pallas_src>

<mosaic_0001>
module attributes {stable_mosaic.version = 11 : i64} {
  func.func @mlp_kernel(%arg0: i32, %arg1: memref<2x128xf32, #tpu.memory_space<vmem>>, %arg2: memref<32x2xf32, #tpu.memory_space<vmem>>, %arg3: memref<32x1xf32, #tpu.memory_space<vmem>>, %arg4: memref<2x32xf32, #tpu.memory_space<vmem>>, %arg5: memref<2x1xf32, #tpu.memory_space<vmem>>, %arg6: memref<2x128xf32, #tpu.memory_space<vmem>>) attributes {dimension_semantics = [#tpu.dimension_semantics<parallel>], iteration_bounds = array<i64: 2>, scalar_prefetch = 0 : i64, scratch_operands = 0 : i64, tpu.core_type = #tpu.core_type<tc>, window_params = [{transform_indices = @transform_0, window_bounds = array<i64: 2, 128>}, {pipeline_mode = #tpu.pipeline_mode<synchronous>, transform_indices = @transform_1, window_bounds = array<i64: 32, 2>}, {pipeline_mode = #tpu.pipeline_mode<synchronous>, transform_indices = @transform_2, window_bounds = array<i64: 32, 1>}, {pipeline_mode = #tpu.pipeline_mode<synchronous>, transform_indices = @transform_3, window_bounds = array<i64: 2, 32>}, {pipeline_mode = #tpu.pipeline_mode<synchronous>, transform_indices = @transform_4, window_bounds = array<i64: 2, 1>}, {transform_indices = @transform_5, window_bounds = array<i64: 2, 128>}]} {
    %c0 = arith.constant 0 : index
    %c0_0 = arith.constant 0 : index
    %0 = vector.load %arg1[%c0, %c0_0] : memref<2x128xf32, #tpu.memory_space<vmem>>, vector<2x128xf32>
    %c0_1 = arith.constant 0 : index
    %c0_2 = arith.constant 0 : index
    %1 = vector.load %arg2[%c0_1, %c0_2] : memref<32x2xf32, #tpu.memory_space<vmem>>, vector<32x2xf32>
    %2 = vector.extract_strided_slice %1 {offsets = [0, 0], sizes = [32, 1], strides = [1, 1]} : vector<32x2xf32> to vector<32x1xf32>
    %3 = vector.extract_strided_slice %0 {offsets = [0, 0], sizes = [1, 128], strides = [1, 1]} : vector<2x128xf32> to vector<1x128xf32>
    %4 = vector.broadcast %2 : vector<32x1xf32> to vector<32x128xf32>
    %5 = vector.broadcast %3 : vector<1x128xf32> to vector<32x128xf32>
    %6 = arith.mulf %4, %5 : vector<32x128xf32>
    %7 = vector.extract_strided_slice %1 {offsets = [0, 1], sizes = [32, 1], strides = [1, 1]} : vector<32x2xf32> to vector<32x1xf32>
    %8 = vector.extract_strided_slice %0 {offsets = [1, 0], sizes = [1, 128], strides = [1, 1]} : vector<2x128xf32> to vector<1x128xf32>
    %9 = vector.broadcast %7 : vector<32x1xf32> to vector<32x128xf32>
    %10 = vector.broadcast %8 : vector<1x128xf32> to vector<32x128xf32>
    %11 = arith.mulf %9, %10 : vector<32x128xf32>
    %12 = arith.addf %6, %11 : vector<32x128xf32>
    %c0_3 = arith.constant 0 : index
    %c0_4 = arith.constant 0 : index
    %13 = vector.load %arg3[%c0_3, %c0_4] : memref<32x1xf32, #tpu.memory_space<vmem>>, vector<32x1xf32>
    %14 = vector.broadcast %13 : vector<32x1xf32> to vector<32x128xf32>
    %15 = arith.addf %12, %14 : vector<32x128xf32>
    %cst = arith.constant 0.000000e+00 : f32
    %16 = vector.broadcast %cst : f32 to vector<32x128xf32>
    %17 = arith.maximumf %15, %16 : vector<32x128xf32>
    %c0_5 = arith.constant 0 : index
    %c0_6 = arith.constant 0 : index
    %18 = vector.load %arg4[%c0_5, %c0_6] : memref<2x32xf32, #tpu.memory_space<vmem>>, vector<2x32xf32>
    %cst_7 = arith.constant dense<0.000000e+00> : vector<2x128xf32>
    %19 = tpu.matmul %18, %17, %cst_7 {dimension_numbers = #tpu.dot_dimension_numbers<[1], [0], [0], [1], [0, 0, 1, 1], [], []>} : vector<2x32xf32>, vector<32x128xf32>, vector<2x128xf32> -> vector<2x128xf32>
    %c0_8 = arith.constant 0 : index
    %c0_9 = arith.constant 0 : index
    %20 = vector.load %arg5[%c0_8, %c0_9] : memref<2x1xf32, #tpu.memory_space<vmem>>, vector<2x1xf32>
    %21 = vector.broadcast %20 : vector<2x1xf32> to vector<2x128xf32>
    %22 = arith.addf %19, %21 : vector<2x128xf32>
    %c0_10 = arith.constant 0 : index
    %c0_11 = arith.constant 0 : index
    %23 = vector.load %arg6[%c0_10, %c0_11] : memref<2x128xf32, #tpu.memory_space<vmem>>, vector<2x128xf32>
    tpu.vector_store %arg6[%c0_10, %c0_11], %22 {strides = array<i32>} : memref<2x128xf32, #tpu.memory_space<vmem>>, vector<2x128xf32>,
    return
  }
  func.func @transform_0(%arg0: i32) -> (i32, i32) {
    %c0_i32 = arith.constant 0 : i32
    %c0_i32_0 = arith.constant 0 : i32
    return %c0_i32, %arg0 : i32, i32
  }
  func.func @transform_1(%arg0: i32) -> (i32, i32) {
    %c0_i32 = arith.constant 0 : i32
    %c0_i32_0 = arith.constant 0 : i32
    %c0_i32_1 = arith.constant 0 : i32
    return %c0_i32, %c0_i32_0 : i32, i32
  }
  func.func @transform_2(%arg0: i32) -> (i32, i32) {
    %c0_i32 = arith.constant 0 : i32
    %c0_i32_0 = arith.constant 0 : i32
    %c0_i32_1 = arith.constant 0 : i32
    return %c0_i32, %c0_i32_0 : i32, i32
  }
  func.func @transform_3(%arg0: i32) -> (i32, i32) {
    %c0_i32 = arith.constant 0 : i32
    %c0_i32_0 = arith.constant 0 : i32
    %c0_i32_1 = arith.constant 0 : i32
    return %c0_i32, %c0_i32_0 : i32, i32
  }
  func.func @transform_4(%arg0: i32) -> (i32, i32) {
    %c0_i32 = arith.constant 0 : i32
    %c0_i32_0 = arith.constant 0 : i32
    %c0_i32_1 = arith.constant 0 : i32
    return %c0_i32, %c0_i32_0 : i32, i32
  }
  func.func @transform_5(%arg0: i32) -> (i32, i32) {
    %c0_i32 = arith.constant 0 : i32
    %c0_i32_0 = arith.constant 0 : i32
    return %c0_i32, %arg0 : i32, i32
  }
}

</mosaic_0001>

<llo_original>
// kernel: tpu_custom_call.1
$region0: #{tpu_custom_call.1}
  #allocation0 [shape = 'u32[]', space=smem, size = 0x4, offset = 0x4, fixed_abs, tag = 'smem constant byte address 0x4 - core index']
  #allocation1 [shape = 'u32[144,128]{1,0:T(1,128)}', space=vmem, size = 0x12000, scoped, tag = 'internal scratch']
  %s0 = inlined_call_operand.vmem [shape: f32[2,200], index: 0, kind: input, shape index: {}]
  %s1 = inlined_call_operand.vmem [shape: f32[32,2], index: 1, kind: input, shape index: {}]
  %s2 = inlined_call_operand.vmem [shape: f32[32,1], index: 2, kind: input, shape index: {}]
  %s3 = inlined_call_operand.vmem [shape: f32[2,32], index: 3, kind: input, shape index: {}]
  %s4 = inlined_call_operand.vmem [shape: f32[2,1], index: 4, kind: input, shape index: {}]
  %s5 = inlined_call_operand.hbm [shape: f32[2,200], index: 5, kind: output, shape index: {}]
  %s6 = sld [smem:[#allocation0]]
  $region53: #{tpu_custom_call.1} parent=0
    _
  %s8 = ssub.s32 1, %s6
  %s9 = scalar_select 0, %s8, %s6
  $region1: #{tpu_custom_call.1} parent=0
    #allocation2 [shape = 'u8[2048]{0}', space=vmem, size = 0x800, scoped, tag = 'output window, operand 0']
    #allocation3 [shape = 's32[2]{0}', space=sflag, size = 0x8, scoped, tag = 'scoped memory for tpu_custom_call.1']
    %10 = vsyncpa [#allocation3], 0
    %s11 = scalar_lea.sflag [#allocation3], 1
    %12 = vsyncpa %s11, 0
    loop: start=0, step=1, limit=4
    $region2: #{tpu_custom_call.1} parent=1 // loop_pre_header
      _
    $region3: #{tpu_custom_call.1} parent=1 // loop_header
      %s14 = sphi 0, %s18
      %p15 = scmp.ge.s32.totalorder %s14, 4
      %s24 = sphi 0, %s26
      %s27 = sphi 0, %s24
      %s28 = sphi 0, %s27
      %s44 = sphi 0, %s28
      %s48 = sphi 0, %s48
      %s50 = sphi 0, %s48
      %s51 = sphi 0, %s50
      %s65 = sphi 0, %s51
      %s69 = sphi 0, %s69
      %s71 = sphi 0, %s69
      %s72 = sphi 0, %s71
      %s86 = sphi 0, %s72
      %s90 = sphi 0, %s90
      %s92 = sphi 0, %s90
      %s93 = sphi 0, %s92
      %s107 = sphi 0, %s93
      %s111 = sphi 0, %s111
      %s113 = sphi 0, %s111
      %s114 = sphi 0, %s113
      %s128 = sphi 0, %s114
      %s134 = sphi 0, %s136
      %s137 = sphi 0, %s134
      %s138 = sphi 0, %s137
      %s154 = sphi 0, %s138
    $region4: #{tpu_custom_call.1} parent=1 // loop_header_branch
      %17 = sbr.rel (%p15) target = $region8
    $region5: #{tpu_custom_call.1} parent=1 // loop_body
      %s19 = ssub.s32 %s14, 1
      %s20 = ssub.s32 %s14, 2
      %s21 = sadd.s32 %s14, 1
      %s22 = ssub.s32 %s14, %s21
      %p23 = scmp.eq.s32.totalorder %s22, 0
      %s25 = sadd.s32 %s24, 1
      %s26 = scalar_select %p23, %s24, %s25
      %p29 = pneg %p23
      %p30 = scmp.eq.s32.totalorder %s14, 1
      %p31 = por %p29, %p30
      %p32 = scmp.ne.s32.totalorder %s24, %s27
      %p33 = scmp.eq.s32.totalorder %s14, 0
      %p34 = por %p32, %p33
      %p35 = scmp.ne.s32.totalorder %s24, %s27
      %p36 = scmp.eq.s32.totalorder %s19, 1
      %p37 = por %p35, %p36
      %p38 = scmp.ne.s32.totalorder %s27, %s28
      %p39 = scmp.eq.s32.totalorder %s19, 0
      %p40 = por %p38, %p39
      %p41 = scmp.ne.s32.totalorder %s27, %s28
      %p42 = scmp.eq.s32.totalorder %s20, 1
      %p43 = por %p41, %p42
      %p45 = scmp.ne.s32.totalorder %s28, %s44
      %p46 = scmp.eq.s32.totalorder %s20, 0
      %p47 = por %p45, %p46
      %s49 = sadd.s32 %s48, 1
      %p52 = scmp.eq.s32.totalorder %s14, 1
      %p53 = scmp.ne.s32.totalorder %s48, %s50
      %p54 = scmp.eq.s32.totalorder %s14, 0
      %p55 = por %p53, %p54
      %p56 = scmp.ne.s32.totalorder %s48, %s50
      %p57 = scmp.eq.s32.totalorder %s19, 1
      %p58 = por %p56, %p57
      %p59 = scmp.ne.s32.totalorder %s50, %s51
      %p60 = scmp.eq.s32.totalorder %s19, 0
      %p61 = por %p59, %p60
      %p62 = scmp.ne.s32.totalorder %s50, %s51
      %p63 = scmp.eq.s32.totalorder %s20, 1
      %p64 = por %p62, %p63
      %p66 = scmp.ne.s32.totalorder %s51, %s65
      %p67 = scmp.eq.s32.totalorder %s20, 0
      %p68 = por %p66, %p67
      %s70 = sadd.s32 %s69, 1
      %p73 = scmp.eq.s32.totalorder %s14, 1
      %p74 = scmp.ne.s32.totalorder %s69, %s71
      %p75 = scmp.eq.s32.totalorder %s14, 0
      %p76 = por %p74, %p75
      %p77 = scmp.ne.s32.totalorder %s69, %s71
      %p78 = scmp.eq.s32.totalorder %s19, 1
      %p79 = por %p77, %p78
      %p80 = scmp.ne.s32.totalorder %s71, %s72
      %p81 = scmp.eq.s32.totalorder %s19, 0
      %p82 = por %p80, %p81
      %p83 = scmp.ne.s32.totalorder %s71, %s72
      %p84 = scmp.eq.s32.totalorder %s20, 1
      %p85 = por %p83, %p84
      %p87 = scmp.ne.s32.totalorder %s72, %s86
      %p88 = scmp.eq.s32.totalorder %s20, 0
      %p89 = por %p87, %p88
      %s91 = sadd.s32 %s90, 1
      %p94 = scmp.eq.s32.totalorder %s14, 1
      %p95 = scmp.ne.s32.totalorder %s90, %s92
      %p96 = scmp.eq.s32.totalorder %s14, 0
      %p97 = por %p95, %p96
      %p98 = scmp.ne.s32.totalorder %s90, %s92
      %p99 = scmp.eq.s32.totalorder %s19, 1
      %p100 = por %p98, %p99
      %p101 = scmp.ne.s32.totalorder %s92, %s93
      %p102 = scmp.eq.s32.totalorder %s19, 0
      %p103 = por %p101, %p102
      %p104 = scmp.ne.s32.totalorder %s92, %s93
      %p105 = scmp.eq.s32.totalorder %s20, 1
      %p106 = por %p104, %p105
      %p108 = scmp.ne.s32.totalorder %s93, %s107
      %p109 = scmp.eq.s32.totalorder %s20, 0
      %p110 = por %p108, %p109
      %s112 = sadd.s32 %s111, 1
      %p115 = scmp.eq.s32.totalorder %s14, 1
      %p116 = scmp.ne.s32.totalorder %s111, %s113
      %p117 = scmp.eq.s32.totalorder %s14, 0
      %p118 = por %p116, %p117
      %p119 = scmp.ne.s32.totalorder %s111, %s113
      %p120 = scmp.eq.s32.totalorder %s19, 1
      %p121 = por %p119, %p120
      %p122 = scmp.ne.s32.totalorder %s113, %s114
      %p123 = scmp.eq.s32.totalorder %s19, 0
      %p124 = por %p122, %p123
      %p125 = scmp.ne.s32.totalorder %s113, %s114
      %p126 = scmp.eq.s32.totalorder %s20, 1
      %p127 = por %p125, %p126
      %p129 = scmp.ne.s32.totalorder %s114, %s128
      %p130 = scmp.eq.s32.totalorder %s20, 0
      %p131 = por %p129, %p130
      %s132 = ssub.s32 %s14, %s21
      %p133 = scmp.eq.s32.totalorder %s132, 0
      %s135 = sadd.s32 %s134, 1
      %s136 = scalar_select %p133, %s134, %s135
      %p139 = pneg %p133
      %p140 = scmp.eq.s32.totalorder %s14, 1
      %p141 = por %p139, %p140
      %p142 = scmp.ne.s32.totalorder %s134, %s137
      %p143 = scmp.eq.s32.totalorder %s14, 0
      %p144 = por %p142, %p143
      %p145 = scmp.ne.s32.totalorder %s134, %s137
      %p146 = scmp.eq.s32.totalorder %s19, 1
      %p147 = por %p145, %p146
      %p148 = scmp.ne.s32.totalorder %s137, %s138
      %p149 = scmp.eq.s32.totalorder %s19, 0
      %p150 = por %p148, %p149
      %p151 = scmp.ne.s32.totalorder %s137, %s138
      %p152 = scmp.eq.s32.totalorder %s20, 1
      %p153 = por %p151, %p152
      %p155 = scmp.ne.s32.totalorder %s138, %s154
      %p156 = scmp.eq.s32.totalorder %s20, 0
      %p157 = por %p155, %p156
      %p158 = scmp.le.s32.totalorder 1, %s14
      %p159 = scmp.lt.s32.totalorder %s14, 3
      %p160 = pnand %p158, %p159
      %p161 = pneg %p160
      // Predicated region
      $region9: #{tpu_custom_call.1} parent=5 // pred_check
        _
      $region10: #{tpu_custom_call.1} parent=5 // pred_check_branch
        %163 = sbr.rel (%p160) target = $region12
      $region11: #{tpu_custom_call.1} parent=5 // pred_region
        %s164 = ssub.s32 %s14, 1
        // Predicated region
        $region13: #{tpu_custom_call.1} parent=11 // pred_check
          %p165 = pneg %p61
        $region14: #{tpu_custom_call.1} parent=11 // pred_check_branch
          %167 = sbr.rel (%p165) target = $region16
        $region15: #{tpu_custom_call.1} parent=11 // pred_region
          _
        $region16: #{tpu_custom_call.1} parent=11 // pred_fallthru
          _
        // Predicated region
        $region17: #{tpu_custom_call.1} parent=11 // pred_check
          %p168 = pneg %p82
        $region18: #{tpu_custom_call.1} parent=11 // pred_check_branch
          %170 = sbr.rel (%p168) target = $region20
        $region19: #{tpu_custom_call.1} parent=11 // pred_region
          _
        $region20: #{tpu_custom_call.1} parent=11 // pred_fallthru
          _
        // Predicated region
        $region21: #{tpu_custom_call.1} parent=11 // pred_check
          %p171 = pneg %p103
        $region22: #{tpu_custom_call.1} parent=11 // pred_check_branch
          %173 = sbr.rel (%p171) target = $region24
        $region23: #{tpu_custom_call.1} parent=11 // pred_region
          _
        $region24: #{tpu_custom_call.1} parent=11 // pred_fallthru
          _
        // Predicated region
        $region25: #{tpu_custom_call.1} parent=11 // pred_check
          %p174 = pneg %p124
        $region26: #{tpu_custom_call.1} parent=11 // pred_check_branch
          %176 = sbr.rel (%p174) target = $region28
        $region27: #{tpu_custom_call.1} parent=11 // pred_region
          _
        $region28: #{tpu_custom_call.1} parent=11 // pred_fallthru
          _
      $region12: #{tpu_custom_call.1} parent=5 // pred_fallthru
        _
      %p177 = scmp.lt.s32.totalorder %s14, 2
      // Predicated region
      $region29: #{tpu_custom_call.1} parent=5 // pred_check
        %p178 = pneg %p177
      $region30: #{tpu_custom_call.1} parent=5 // pred_check_branch
        %180 = sbr.rel (%p178) target = $region32
      $region31: #{tpu_custom_call.1} parent=5 // pred_region
        // Predicated region
        $region33: #{tpu_custom_call.1} parent=31 // pred_check
          %p181 = pneg %p34
        $region34: #{tpu_custom_call.1} parent=31 // pred_check_branch
          %183 = sbr.rel (%p181) target = $region36
        $region35: #{tpu_custom_call.1} parent=31 // pred_region
          %p184 = scmp.lt.s32.totalorder %s14, 1
          %s185 = scalar_select %p184, %s14, 1
          %s186 = smul.addr %s185, 2
          %s187 = scalar_lea.vmem %s0, %s186
        $region36: #{tpu_custom_call.1} parent=31 // pred_fallthru
          _
      $region32: #{tpu_custom_call.1} parent=5 // pred_fallthru
        _
      %p188 = scmp.le.s32.totalorder 1, %s14
      %p189 = scmp.lt.s32.totalorder %s14, 3
      %p190 = pnand %p188, %p189
      %p191 = pneg %p190
      // Predicated region
      $region37: #{tpu_custom_call.1} parent=5 // pred_check
        _
      $region38: #{tpu_custom_call.1} parent=5 // pred_check_branch
        %193 = sbr.rel (%p190) target = $region40
      $region39: #{tpu_custom_call.1} parent=5 // pred_region
        %s194 = ssub.s32 %s14, 1
        %p195 = scmp.lt.s32.totalorder %s19, 1
        %s196 = scalar_select %p195, %s19, 1
        %s197 = smul.addr %s196, 2
        %s198 = scalar_lea.vmem %s0, %s197
        %p199 = pneg %p40
        %p200 = pneg %p37
        %p201 = pneg %p61
        %p202 = pneg %p58
        %p203 = pneg %p82
        %p204 = pneg %p79
        %p205 = pneg %p103
        %p206 = pneg %p100
        %p207 = pneg %p124
        %p208 = pneg %p121
        %p209 = pneg %p150
        %p210 = pneg %p147
        %s211 = sand.u32 %s137, 1
        %s212 = scalar_lea.sflag [#allocation3], %s211
        %s213 = sand.u32 %s137, 1
        %s214 = smul.addr %s213, 2
        %s215 = scalar_lea.vmem [#allocation2], %s214
        %p216 = scmp.lt.s32.totalorder %s19, 1
        %s217 = scalar_select %p216, %s19, 1
        %s218 = smul.addr %s217, 2
        %s219 = scalar_lea.vmem %s0, %s218
        %v220 = vld [vmem:[%s219] sm:$0x3]
        %v221 = vld [vmem:[%s1] sm:$0xff]
        %v222 = vld [vmem:[%s1 + $0x8] sm:$0xff]
        %v223 = vld [vmem:[%s1 + $0x10] sm:$0xff]
        %v224 = vld [vmem:[%s1 + $0x18] sm:$0xff]
        %226 = vset.pattern.permute.xlu0 0
        %227 = vperm.xlu0 %226, %v221
        %v228 = vpop.permute.xlu0 %227
        %231 = vset.pattern.permute.xlu0 0
        %232 = vperm.xlu0 %231, %v222
        %v233 = vpop.permute.xlu0 %232
        %236 = vset.pattern.permute.xlu0 0
        %237 = vperm.xlu0 %236, %v223
        %v238 = vpop.permute.xlu0 %237
        %241 = vset.pattern.permute.xlu0 0
        %242 = vperm.xlu0 %241, %v224
        %v243 = vpop.permute.xlu0 %242
        %v245 = vlaneseq
        %v246 = vshrl.u32 %v245, 7
        %v247 = vsub.s32 0, %v246
        %v248 = vrot.slane %v220, %v247
        %v249 = vmul.f32 %v228, %v248
        %v250 = vmul.f32 %v233, %v248
        %v251 = vmul.f32 %v238, %v248
        %v252 = vmul.f32 %v243, %v248
        %253 = vset.pattern.permute.xlu0 1
        %254 = vperm.xlu0 %253, %v221
        %v255 = vpop.permute.xlu0 %254
        %257 = vset.pattern.permute.xlu0 1
        %258 = vperm.xlu0 %257, %v222
        %v259 = vpop.permute.xlu0 %258
        %261 = vset.pattern.permute.xlu0 1
        %262 = vperm.xlu0 %261, %v223
        %v263 = vpop.permute.xlu0 %262
        %265 = vset.pattern.permute.xlu0 1
        %266 = vperm.xlu0 %265, %v224
        %v267 = vpop.permute.xlu0 %266
        %v269 = vlaneseq
        %v270 = vshrl.u32 %v269, 7
        %v271 = vsub.s32 1, %v270
        %v272 = vrot.slane %v220, %v271
        %v273 = vmul.f32 %v255, %v272
        %v274 = vmul.f32 %v259, %v272
        %v275 = vmul.f32 %v263, %v272
        %v276 = vmul.f32 %v267, %v272
        %v277 = vadd.f32 %v249, %v273
        %v278 = vadd.f32 %v250, %v274
        %v279 = vadd.f32 %v251, %v275
        %v280 = vadd.f32 %v252, %v276
        %v281 = vld [vmem:[%s2] sm:$0xff]
        %v282 = vld [vmem:[%s2 + $0x8] sm:$0xff]
        %v283 = vld [vmem:[%s2 + $0x10] sm:$0xff]
        %v284 = vld [vmem:[%s2 + $0x18] sm:$0xff]
        %286 = vset.pattern.permute.xlu0 0
        %287 = vperm.xlu0 %286, %v281
        %v288 = vpop.permute.xlu0 %287
        %291 = vset.pattern.permute.xlu0 0
        %292 = vperm.xlu0 %291, %v282
        %v293 = vpop.permute.xlu0 %292
        %296 = vset.pattern.permute.xlu0 0
        %297 = vperm.xlu0 %296, %v283
        %v298 = vpop.permute.xlu0 %297
        %301 = vset.pattern.permute.xlu0 0
        %302 = vperm.xlu0 %301, %v284
        %v303 = vpop.permute.xlu0 %302
        %v305 = vadd.f32 %v277, %v288
        %v306 = vadd.f32 %v278, %v293
        %v307 = vadd.f32 %v279, %v298
        %v308 = vadd.f32 %v280, %v303
        %v309 = vmax.f32 %v305, 0.0
        %v310 = vmax.f32 %v306, 0.0
        %v311 = vmax.f32 %v307, 0.0
        %v312 = vmax.f32 %v308, 0.0
        %v313 = vld [vmem:[%s3] sm:$0x3]
        %v314 = vld [vmem:[%s4] sm:$0x3]
        %316 = vset.pattern.permute.xlu0 0
        %317 = vperm.xlu0 %316, %v314
        %v318 = vpop.permute.xlu0 %317
        %vm320 = vcmask 261120
        %v322 = vsel %vm320, %v313, 0
        %324 = vmatprep.subr.mxu0 0.0
        %325 = vmatpush1.msra.mxu0 %v309
        %326 = vmatprep.subr.mxu0 0.0
        %327 = vmatpush1.msra.mxu0 %v310
        %328 = vmatprep.subr.mxu0 0.0
        %329 = vmatpush1.msra.mxu0 %v311
        %330 = vmatprep.subr.mxu0 0.0
        %331 = vmatpush1.msra.mxu0 %v312
        %332 = vmatprep.subr.mxu0 0.0
        %333 = vmatpush1.msra.mxu0 0.0
        %334 = vmatprep.subr.mxu0 0.0
        %335 = vmatpush1.msra.mxu0 0.0
        %336 = vmatprep.subr.mxu0 0.0
        %337 = vmatpush1.msra.mxu0 0.0
        %338 = vmatprep.subr.mxu0 0.0
        %339 = vmatpush1.msra.mxu0 0.0
        %340 = vmatprep.subr.mxu0 0.0
        %341 = vmatpush1.msra.mxu0 0.0
        %342 = vmatprep.subr.mxu0 0.0
        %343 = vmatpush1.msra.mxu0 0.0
        %344 = vmatprep.subr.mxu0 0.0
        %345 = vmatpush1.msra.mxu0 0.0
        %346 = vmatprep.subr.mxu0 0.0
        %347 = vmatpush1.msra.mxu0 0.0
        %348 = vmatprep.subr.mxu0 0.0
        %349 = vmatpush1.msra.mxu0 0.0
        %350 = vmatprep.subr.mxu0 0.0
        %351 = vmatpush1.msra.mxu0 0.0
        %352 = vmatprep.subr.mxu0 0.0
        %353 = vmatpush1.msra.mxu0 0.0
        %354 = vmatprep.subr.mxu0 0.0
        %355 = vmatpush1.msra.mxu0 0.0
        %356 = vmatprep.subr.mxu0 0.0
        %357 = vmatpush1.msra.mxu0 0.0
        %358 = vmatprep.subr.mxu0 0.0
        %359 = vmatpush1.msra.mxu0 0.0
        %360 = vmatprep.subr.mxu0 0.0
        %361 = vmatpush1.msra.mxu0 0.0
        %362 = vmatprep.subr.mxu0 0.0
        %363 = vmatpush1.msra.mxu0 0.0
        %364 = vmatprep.subr.mxu0 0.0
        %365 = vmatpush1.msra.mxu0 0.0
        %366 = vmatprep.subr.mxu0 0.0
        %367 = vmatpush1.msra.mxu0 0.0
        %368 = vmatprep.subr.mxu0 0.0
        %369 = vmatpush1.msra.mxu0 0.0
        %370 = vmatprep.subr.mxu0 0.0
        %371 = vmatpush1.msra.mxu0 0.0
        %372 = vmatprep.subr.mxu0 0.0
        %373 = vmatpush1.msra.mxu0 0.0
        %374 = vmatprep.subr.mxu0 0.0
        %375 = vmatpush1.msra.mxu0 0.0
        %376 = vmatprep.subr.mxu0 0.0
        %377 = vmatpush1.msra.mxu0 0.0
        %378 = vmatprep.subr.mxu0 0.0
        %379 = vmatpush1.msra.mxu0 0.0
        %380 = vmatprep.subr.mxu0 0.0
        %381 = vmatpush1.msra.mxu0 0.0
        %382 = vmatprep.subr.mxu0 0.0
        %383 = vmatpush1.msra.mxu0 0.0
        %384 = vmatprep.subr.mxu0 0.0
        %385 = vmatpush1.msra.mxu0 0.0
        %386 = vmatprep.subr.mxu0 0.0
        %387 = vmatpush1.msra.mxu0 0.0
        %388 = vmatprep.mubr.f32.mxu0 0.0
        %389 = vmatmul.mubr.f32.gmra.mrb[0].mxu0 %v322
        %v390 = vpop.f32.mrb[0].mxu0
        %v391 = vadd.f32 %v318, %v390
        %v392 = vpop.f32.mrb[0].mxu0
        %393 = vdwg.mxu0
        %394 = vst [vmem:[%s215] sm:$0x3] %v391
        %s395 = sand.u32 %s137, 1
        %s396 = scalar_lea.sflag [#allocation3], %s395
        %s397 = sand.u32 %s137, 1
        %s398 = smul.addr %s397, 2
        %s399 = scalar_lea.vmem [#allocation2], %s398
        // Predicated region
        $region41: #{tpu_custom_call.1} parent=39 // pred_check
          %p400 = pneg %p147
        $region42: #{tpu_custom_call.1} parent=39 // pred_check_branch
          %402 = sbr.rel (%p400) target = $region44
        $region43: #{tpu_custom_call.1} parent=39 // pred_region
          %s404 = ssub.s32 32, 32
          %405 = vsyncadd %s396, %s404
          %s406 = smul.addr %s19, 32
          %s407 = scalar_lea.hbm %s5, %s406
          %s409 = sshll.u32 %s399, 4
          %s410 = int_to_ptr.vmem [resolvable:$true] %s409
          %412 = dma.vmem_to_hbm [thread:$0]  %s410, 32, %s407, %s396
        $region44: #{tpu_custom_call.1} parent=39 // pred_fallthru
          _
      $region40: #{tpu_custom_call.1} parent=5 // pred_fallthru
        _
      %p413 = scmp.le.s32.totalorder 2, %s14
      // Predicated region
      $region45: #{tpu_custom_call.1} parent=5 // pred_check
        %p414 = pneg %p413
      $region46: #{tpu_custom_call.1} parent=5 // pred_check_branch
        %416 = sbr.rel (%p414) target = $region48
      $region47: #{tpu_custom_call.1} parent=5 // pred_region
        %s417 = ssub.s32 %s14, 2
        // Predicated region
        $region49: #{tpu_custom_call.1} parent=47 // pred_check
          %p418 = pneg %p153
        $region50: #{tpu_custom_call.1} parent=47 // pred_check_branch
          %420 = sbr.rel (%p418) target = $region52
        $region51: #{tpu_custom_call.1} parent=47 // pred_region
          %s421 = sand.u32 %s138, 1
          %s422 = scalar_lea.sflag [#allocation3], %s421
          %s423 = sand.u32 %s138, 1
          %s424 = smul.addr %s423, 2
          %s425 = scalar_lea.vmem [#allocation2], %s424
          %426 = dma.done %s422, 32
        $region52: #{tpu_custom_call.1} parent=47 // pred_fallthru
          _
      $region48: #{tpu_custom_call.1} parent=5 // pred_fallthru
        _
    $region6: #{tpu_custom_call.1} parent=1 // loop_footer
      %s18 = sadd.s32 1, %s14
    $region7: #{tpu_custom_call.1} parent=1 // loop_footer_branch
      %13 = sbr.rel target = $region3
    $region8: #{tpu_custom_call.1} parent=1 // loop_exit
      _
    %427 = vsyncpa [#allocation3], 1
    %s428 = scalar_lea.sflag [#allocation3], 1
    %429 = vsyncpa %s428, 1

</llo_original>
